<compile_context>
chip_gen: v7x
topology: tpu7x:2x2x1
jax: 0.10.0
libtpu: 0.0.40
codegen_flags: <defaults>
</compile_context>

<pallas_src>
import jax
import jax.numpy as jnp
from jax.experimental import pallas as pl
from jax.experimental.pallas import tpu as pltpu


# ---------------------------------------------------------------------------
# Kernel: fused multiscale Conv1d (per-tap accumulating dots) + bias + PReLU
# on one full batch row.
# ---------------------------------------------------------------------------
def _multiscale_conv_prelu_kernel(x_ref, w_ref, b_ref, alpha_ref, o_ref):
    """
    x_ref:     (C_in, L_pad + k_max - 1)  halo-padded input row (f32 or bf16)
    w_ref:     (k_max, C_out, C_in)       per-tap weight slabs (same dtype as x)
    b_ref:     (C_out, 1)  f32            bias
    alpha_ref: (1, 1) SMEM f32            PReLU slope (single shared parameter)
    o_ref:     (C_out, L_pad) f32
    """
    k_max = w_ref.shape[0]
    l_out = o_ref.shape[-1]

    acc = jnp.zeros(o_ref.shape, jnp.float32)
    # Static unrolled tap loop: k_max small (e.g. 5).  Each tap is a static lane-shifted
    # window of the VMEM-resident row feeding one accumulating MXU dot (f32 accumulation).
    for t in range(k_max):
        x_t = x_ref[:, t:t + l_out]                      # (C_in, L_pad), static lane slice
        acc = acc + jnp.dot(w_ref[t], x_t,
                            preferred_element_type=jnp.float32)

    acc = acc + b_ref[...]                               # bias broadcast over lanes (f32)
    alpha = alpha_ref[0, 0]
    acc = jnp.where(acc >= 0.0, acc, alpha * acc)        # PReLU (shared slope), f32 math
    o_ref[...] = acc.astype(o_ref.dtype)


def _round_up(x, m):
    return (x + m - 1) // m * m


def _conv_prelu_pallas(xp, w_taps, bias, alpha):
    """xp: (N, C_in, L_halo), w_taps: (k_max, C_out, C_in) -> (N, C_out, L_pad) f32."""
    N, C_in, L_halo = xp.shape
    k_max, C_out, _ = w_taps.shape
    L_pad = L_halo - (k_max - 1)

    itemsize = jnp.dtype(xp.dtype).itemsize
    # Double-buffered per-step working set (input row + output row); keep v7x headroom.
    working_set = 2 * (C_in * L_halo * itemsize + C_out * L_pad * 4)
    if working_set > 40 * 1024 * 1024:
        raise ValueError(
            "Sequence too long for the full-row-resident strategy "
            f"(working set {working_set} B); add an L-tile grid axis with halo'd windows.")

    flops = 2 * N * C_out * C_in * k_max * L_pad
    bytes_accessed = (N * C_in * L_halo * itemsize            # input rows
                      + k_max * C_out * C_in * itemsize       # weights
                      + C_out * 4                             # bias
                      + N * C_out * L_pad * 4)                # output rows

    return pl.pallas_call(
        _multiscale_conv_prelu_kernel,
        out_shape=jax.ShapeDtypeStruct((N, C_out, L_pad), jnp.float32),
        grid=(N,),
        in_specs=[
            pl.BlockSpec((pl.Squeezed(), C_in, L_halo), lambda n: (n, 0, 0)),
            pl.BlockSpec((k_max, C_out, C_in), lambda n: (0, 0, 0)),
            pl.BlockSpec((C_out, 1), lambda n: (0, 0)),
            pl.BlockSpec((1, 1), lambda n: (0, 0),
                         memory_space=pltpu.MemorySpace.SMEM),
        ],
        out_specs=pl.BlockSpec((pl.Squeezed(), C_out, L_pad), lambda n: (n, 0, 0)),
        compiler_params=pltpu.CompilerParams(
            dimension_semantics=("parallel",),          # N >= 2 -> both v7x TensorCores active
            vmem_limit_bytes=48 * 1024 * 1024,          # <= ~48 MiB headroom on v7x (64 MiB phys)
        ),
        cost_estimate=pl.CostEstimate(
            flops=int(flops), transcendentals=0, bytes_accessed=int(bytes_accessed)),
    )(xp, w_taps, bias, alpha)


# ---------------------------------------------------------------------------
# One-time parameter preparation (hoisted out of the per-call path).
# ---------------------------------------------------------------------------
def prepare_upsampling_params(conv_weights, conv_biases):
    """conv_weights[i]: (C_out_per_conv, C_in, k_i).  Returns (w_taps, bias_col)."""
    kernel_sizes = [int(w.shape[2]) for w in conv_weights]
    assert all(k % 2 == 1 for k in kernel_sizes), "kernel sizes must be odd"
    k_max = max(kernel_sizes)
    padded = []
    for w in conv_weights:
        k = int(w.shape[2])
        side = (k_max - k) // 2                  # center smaller kernels inside k_max taps
        padded.append(jnp.pad(w, ((0, 0), (0, 0), (side, side))))
    w_full = jnp.concatenate(padded, axis=0)     # (C_out, C_in, k_max)
    w_taps = jnp.transpose(w_full, (2, 0, 1))    # (k_max, C_out, C_in)
    bias = jnp.concatenate(conv_biases, axis=0)[:, None].astype(jnp.float32)  # (C_out, 1)
    return w_taps, bias


# ---------------------------------------------------------------------------
# Forward pass.
# ---------------------------------------------------------------------------
def upsampling_block_forward(x, w_taps, bias, prelu_alpha, *, r_subpixel,
                             stream_dtype=jnp.float32):
    """x: (N, C_in, L).  Returns (N, C_out // r, L * r) float32.

    stream_dtype controls the HBM/VMEM dtype of the activation + weight DMA streams only;
    MXU accumulation and bias/PReLU math stay in f32 (v5e-safe).
    """
    N, C_in, L = x.shape
    k_max, C_out, _ = w_taps.shape
    pad = (k_max - 1) // 2

    # Lane-dense output length (multiple of 128); "same"-conv halo on both sides plus the
    # right-pad up to the lane-dense length.
    L_pad = _round_up(L, 128)
    xp = jnp.pad(x, ((0, 0), (0, 0), (pad, pad + (L_pad - L))))
    xp = xp.astype(stream_dtype)                           # (N, C_in, L_pad + k_max - 1)
    w = w_taps.astype(stream_dtype)
    alpha = jnp.reshape(prelu_alpha.astype(jnp.float32), (1, 1))

    y = _conv_prelu_pallas(xp, w, bias, alpha)             # (N, C_out, L_pad) f32
    y = y[:, :, :L]                                        # drop lane padding (tail only)

    # Subpixel shuffle (layout-only glue; see TODO about in-kernel fusion).
    r = r_subpixel
    y = y.reshape(N, C_out // r, r, L)
    y = jnp.transpose(y, (0, 1, 3, 2)).reshape(N, C_out // r, L * r)
    return y


# ---------------------------------------------------------------------------
# Pure-JAX reference (per-scale Conv1d + concat + PReLU + subpixel).
# ---------------------------------------------------------------------------
def _reference_forward(x, conv_weights, conv_biases, prelu_alpha, r):
    outs = []
    for w, b in zip(conv_weights, conv_biases):
        k = w.shape[2]
        pad = (k - 1) // 2
        y = jax.lax.conv_general_dilated(
            x, w, window_strides=(1,), padding=[(pad, pad)],
            dimension_numbers=("NCH", "OIH", "NCH"))
        outs.append(y + b[None, :, None])
    y = jnp.concatenate(outs, axis=1)
    y = jnp.where(y >= 0.0, y, prelu_alpha * y)
    n, c, l = y.shape
    y = y.reshape(n, c // r, r, l)
    y = jnp.transpose(y, (0, 1, 3, 2)).reshape(n, c // r, l * r)
    return y


if __name__ == "__main__":
    # Module config (small, consistent with the asserts in UpsamplingBlock.__init__):
    in_channels = 4
    out_channels = 8
    kernel_sizes = [3, 5]
    r_subpixel = 2
    # out_channels % (len(kernel_sizes) * r_subpixel) == 0  -> 8 % 4 == 0  OK
    c_per_conv = out_channels // len(kernel_sizes)

    N, L = 2, 16

    key = jax.random.PRNGKey(0)
    k_x, *k_params = jax.random.split(key, 1 + len(kernel_sizes))

    x = jax.random.normal(k_x, (N, in_channels, L), dtype=jnp.float32)

    conv_weights, conv_biases = [], []
    for i, ks in enumerate(kernel_sizes):
        kw, kb = jax.random.split(k_params[i], 2)
        fan_in = in_channels * ks
        bound = 1.0 / (fan_in ** 0.5)
        conv_weights.append(
            jax.random.uniform(kw, (c_per_conv, in_channels, ks),
                               minval=-bound, maxval=bound, dtype=jnp.float32))
        conv_biases.append(
            jax.random.uniform(kb, (c_per_conv,),
                               minval=-bound, maxval=bound, dtype=jnp.float32))

    prelu_alpha = jnp.array(0.2, dtype=jnp.float32)  # PReLU(init=0.2), single shared slope

    # Parameter prep hoisted out of the forward path (done once at load time).
    w_taps, bias_col = prepare_upsampling_params(conv_weights, conv_biases)
    w_taps = jax.block_until_ready(w_taps)

    forward = jax.jit(upsampling_block_forward,
                      static_argnames=("r_subpixel", "stream_dtype"))

    ref = _reference_forward(x, conv_weights, conv_biases, prelu_alpha, r_subpixel)

    # f32 stream: bit-accurate path.
    out = forward(x, w_taps, bias_col, prelu_alpha,
                  r_subpixel=r_subpixel, stream_dtype=jnp.float32)
    out = jax.block_until_ready(out)
    assert out.shape == (N, out_channels // r_subpixel, L * r_subpixel), out.shape
    if not jnp.allclose(out, ref, atol=1e-5, rtol=1e-5):
        raise AssertionError("Pallas kernel output (f32 stream) does not match reference")

    # bf16 DMA-stream path (perf option for v5e/v6e/v7x): f32 accumulation, looser tolerance.
    out_bf16 = forward(x, w_taps, bias_col, prelu_alpha,
                       r_subpixel=r_subpixel, stream_dtype=jnp.bfloat16)
    out_bf16 = jax.block_until_ready(out_bf16)
    if not jnp.allclose(out_bf16, ref, atol=1e-1, rtol=1e-1):
        raise AssertionError("Pallas kernel output (bf16 stream) does not match reference")

    print("KERNEL_OK")
</pallas_src>

<mosaic_0001>
module attributes {stable_mosaic.version = 11 : i64} {
  func.func @_multiscale_conv_prelu_kernel(%arg0: i32, %arg1: memref<1x4x132xf32, #tpu.memory_space<vmem>>, %arg2: memref<5x8x4xf32, #tpu.memory_space<vmem>>, %arg3: memref<8x1xf32, #tpu.memory_space<vmem>>, %arg4: memref<1x1xf32, #tpu.memory_space<smem>>, %arg5: memref<1x8x128xf32, #tpu.memory_space<vmem>>) attributes {dimension_semantics = [#tpu.dimension_semantics<parallel>], iteration_bounds = array<i64: 2>, scalar_prefetch = 0 : i64, scratch_operands = 0 : i64, tpu.core_type = #tpu.core_type<tc>, window_params = [{transform_indices = @transform_0, window_bounds = array<i64: 1, 4, 132>}, {pipeline_mode = #tpu.pipeline_mode<synchronous>, transform_indices = @transform_1, window_bounds = array<i64: 5, 8, 4>}, {pipeline_mode = #tpu.pipeline_mode<synchronous>, transform_indices = @transform_2, window_bounds = array<i64: 8, 1>}, {transform_indices = @transform_3, window_bounds = array<i64: 1, 1>}, {transform_indices = @transform_4, window_bounds = array<i64: 1, 8, 128>}]} {
    %cst = arith.constant 0.000000e+00 : f32
    %0 = vector.broadcast %cst : f32 to vector<8x128xf32>
    %c0 = arith.constant 0 : index
    %c0_0 = arith.constant 0 : index
    %c0_1 = arith.constant 0 : index
    %1 = vector.load %arg1[%c0, %c0_0, %c0_1] : memref<1x4x132xf32, #tpu.memory_space<vmem>>, vector<1x4x128xf32>
    %2 = vector.shape_cast %1 : vector<1x4x128xf32> to vector<4x128xf32>
    %c0_2 = arith.constant 0 : index
    %c0_3 = arith.constant 0 : index
    %c0_4 = arith.constant 0 : index
    %3 = vector.load %arg2[%c0_2, %c0_3, %c0_4] : memref<5x8x4xf32, #tpu.memory_space<vmem>>, vector<1x8x4xf32>
    %4 = vector.shape_cast %3 : vector<1x8x4xf32> to vector<8x4xf32>
    %cst_5 = arith.constant dense<0.000000e+00> : vector<8x128xf32>
    %5 = tpu.matmul %4, %2, %cst_5 {dimension_numbers = #tpu.dot_dimension_numbers<[1], [0], [0], [1], [0, 0, 1, 1], [], []>} : vector<8x4xf32>, vector<4x128xf32>, vector<8x128xf32> -> vector<8x128xf32>
    %6 = arith.addf %0, %5 : vector<8x128xf32>
    %c0_6 = arith.constant 0 : index
    %c0_7 = arith.constant 0 : index
    %c1 = arith.constant 1 : index
    %7 = vector.load %arg1[%c0_6, %c0_7, %c1] : memref<1x4x132xf32, #tpu.memory_space<vmem>>, vector<1x4x128xf32>
    %8 = vector.shape_cast %7 : vector<1x4x128xf32> to vector<4x128xf32>
    %c1_8 = arith.constant 1 : index
    %c0_9 = arith.constant 0 : index
    %c0_10 = arith.constant 0 : index
    %9 = vector.load %arg2[%c1_8, %c0_9, %c0_10] : memref<5x8x4xf32, #tpu.memory_space<vmem>>, vector<1x8x4xf32>
    %10 = vector.shape_cast %9 : vector<1x8x4xf32> to vector<8x4xf32>
    %cst_11 = arith.constant dense<0.000000e+00> : vector<8x128xf32>
    %11 = tpu.matmul %10, %8, %cst_11 {dimension_numbers = #tpu.dot_dimension_numbers<[1], [0], [0], [1], [0, 0, 1, 1], [], []>} : vector<8x4xf32>, vector<4x128xf32>, vector<8x128xf32> -> vector<8x128xf32>
    %12 = arith.addf %6, %11 : vector<8x128xf32>
    %c0_12 = arith.constant 0 : index
    %c0_13 = arith.constant 0 : index
    %c2 = arith.constant 2 : index
    %13 = vector.load %arg1[%c0_12, %c0_13, %c2] : memref<1x4x132xf32, #tpu.memory_space<vmem>>, vector<1x4x128xf32>
    %14 = vector.shape_cast %13 : vector<1x4x128xf32> to vector<4x128xf32>
    %c2_14 = arith.constant 2 : index
    %c0_15 = arith.constant 0 : index
    %c0_16 = arith.constant 0 : index
    %15 = vector.load %arg2[%c2_14, %c0_15, %c0_16] : memref<5x8x4xf32, #tpu.memory_space<vmem>>, vector<1x8x4xf32>
    %16 = vector.shape_cast %15 : vector<1x8x4xf32> to vector<8x4xf32>
    %cst_17 = arith.constant dense<0.000000e+00> : vector<8x128xf32>
    %17 = tpu.matmul %16, %14, %cst_17 {dimension_numbers = #tpu.dot_dimension_numbers<[1], [0], [0], [1], [0, 0, 1, 1], [], []>} : vector<8x4xf32>, vector<4x128xf32>, vector<8x128xf32> -> vector<8x128xf32>
    %18 = arith.addf %12, %17 : vector<8x128xf32>
    %c0_18 = arith.constant 0 : index
    %c0_19 = arith.constant 0 : index
    %c3 = arith.constant 3 : index
    %19 = vector.load %arg1[%c0_18, %c0_19, %c3] : memref<1x4x132xf32, #tpu.memory_space<vmem>>, vector<1x4x128xf32>
    %20 = vector.shape_cast %19 : vector<1x4x128xf32> to vector<4x128xf32>
    %c3_20 = arith.constant 3 : index
    %c0_21 = arith.constant 0 : index
    %c0_22 = arith.constant 0 : index
    %21 = vector.load %arg2[%c3_20, %c0_21, %c0_22] : memref<5x8x4xf32, #tpu.memory_space<vmem>>, vector<1x8x4xf32>
    %22 = vector.shape_cast %21 : vector<1x8x4xf32> to vector<8x4xf32>
    %cst_23 = arith.constant dense<0.000000e+00> : vector<8x128xf32>
    %23 = tpu.matmul %22, %20, %cst_23 {dimension_numbers = #tpu.dot_dimension_numbers<[1], [0], [0], [1], [0, 0, 1, 1], [], []>} : vector<8x4xf32>, vector<4x128xf32>, vector<8x128xf32> -> vector<8x128xf32>
    %24 = arith.addf %18, %23 : vector<8x128xf32>
    %c0_24 = arith.constant 0 : index
    %c0_25 = arith.constant 0 : index
    %c4 = arith.constant 4 : index
    %25 = vector.load %arg1[%c0_24, %c0_25, %c4] : memref<1x4x132xf32, #tpu.memory_space<vmem>>, vector<1x4x128xf32>
    %26 = vector.shape_cast %25 : vector<1x4x128xf32> to vector<4x128xf32>
    %c4_26 = arith.constant 4 : index
    %c0_27 = arith.constant 0 : index
    %c0_28 = arith.constant 0 : index
    %27 = vector.load %arg2[%c4_26, %c0_27, %c0_28] : memref<5x8x4xf32, #tpu.memory_space<vmem>>, vector<1x8x4xf32>
    %28 = vector.shape_cast %27 : vector<1x8x4xf32> to vector<8x4xf32>
    %cst_29 = arith.constant dense<0.000000e+00> : vector<8x128xf32>
    %29 = tpu.matmul %28, %26, %cst_29 {dimension_numbers = #tpu.dot_dimension_numbers<[1], [0], [0], [1], [0, 0, 1, 1], [], []>} : vector<8x4xf32>, vector<4x128xf32>, vector<8x128xf32> -> vector<8x128xf32>
    %30 = arith.addf %24, %29 : vector<8x128xf32>
    %c0_30 = arith.constant 0 : index
    %c0_31 = arith.constant 0 : index
    %31 = vector.load %arg3[%c0_30, %c0_31] : memref<8x1xf32, #tpu.memory_space<vmem>>, vector<8x1xf32>
    %32 = vector.broadcast %31 : vector<8x1xf32> to vector<8x128xf32>
    %33 = arith.addf %30, %32 : vector<8x128xf32>
    %c0_32 = arith.constant 0 : index
    %c0_33 = arith.constant 0 : index
    %34 = memref.load %arg4[%c0_32, %c0_33] : memref<1x1xf32, #tpu.memory_space<smem>>
    %cst_34 = arith.constant 0.000000e+00 : f32
    %35 = vector.broadcast %cst_34 : f32 to vector<8x128xf32>
    %36 = arith.cmpf oge, %33, %35 : vector<8x128xf32>
    %37 = vector.broadcast %34 : f32 to vector<8x128xf32>
    %38 = arith.mulf %37, %33 : vector<8x128xf32>
    %39 = arith.select %36, %33, %38 : vector<8x128xi1>, vector<8x128xf32>
    %c0_35 = arith.constant 0 : index
    %c0_36 = arith.constant 0 : index
    %c0_37 = arith.constant 0 : index
    %40 = vector.load %arg5[%c0_35, %c0_36, %c0_37] : memref<1x8x128xf32, #tpu.memory_space<vmem>>, vector<1x8x128xf32>
    %41 = vector.shape_cast %40 : vector<1x8x128xf32> to vector<8x128xf32>
    %42 = vector.shape_cast %39 : vector<8x128xf32> to vector<1x8x128xf32>
    tpu.vector_store %arg5[%c0_35, %c0_36, %c0_37], %42 {strides = array<i32>} : memref<1x8x128xf32, #tpu.memory_space<vmem>>, vector<1x8x128xf32>,
    return
  }
  func.func @transform_0(%arg0: i32) -> (i32, i32, i32) {
    %c0_i32 = arith.constant 0 : i32
    %c0_i32_0 = arith.constant 0 : i32
    %c0_i32_1 = arith.constant 0 : i32
    return %arg0, %c0_i32, %c0_i32_0 : i32, i32, i32
  }
  func.func @transform_1(%arg0: i32) -> (i32, i32, i32) {
    %c0_i32 = arith.constant 0 : i32
    %c0_i32_0 = arith.constant 0 : i32
    %c0_i32_1 = arith.constant 0 : i32
    %c0_i32_2 = arith.constant 0 : i32
    return %c0_i32, %c0_i32_0, %c0_i32_1 : i32, i32, i32
  }
  func.func @transform_2(%arg0: i32) -> (i32, i32) {
    %c0_i32 = arith.constant 0 : i32
    %c0_i32_0 = arith.constant 0 : i32
    %c0_i32_1 = arith.constant 0 : i32
    return %c0_i32, %c0_i32_0 : i32, i32
  }
  func.func @transform_3(%arg0: i32) -> (i32, i32) {
    %c0_i32 = arith.constant 0 : i32
    %c0_i32_0 = arith.constant 0 : i32
    %c0_i32_1 = arith.constant 0 : i32
    return %c0_i32, %c0_i32_0 : i32, i32
  }
  func.func @transform_4(%arg0: i32) -> (i32, i32, i32) {
    %c0_i32 = arith.constant 0 : i32
    %c0_i32_0 = arith.constant 0 : i32
    %c0_i32_1 = arith.constant 0 : i32
    return %arg0, %c0_i32, %c0_i32_0 : i32, i32, i32
  }
}

</mosaic_0001>

<llo_original>
// kernel: upsampling_block_forward.1
$region0: #{upsampling_block_forward.1}
  #allocation0 [shape = 'u32[]', space=smem, size = 0x4, offset = 0x4, fixed_abs, tag = 'smem constant byte address 0x4 - core index']
  #allocation1 [shape = 'u32[144,128]{1,0:T(1,128)}', space=vmem, size = 0x12000, scoped, tag = 'internal scratch']
  #allocation2 [shape = 'f32[1,1]{1,0:T(1,128)S(6)}', space=smem, size = 0x200, scoped, tag = 'scoped memory for upsampling_block_forward.1']
  %s0 = inlined_call_operand.vmem [shape: f32[2,4,132], index: 0, kind: input, shape index: {}]
  %s1 = inlined_call_operand.vmem [shape: f32[5,8,4], index: 1, kind: input, shape index: {}]
  %s2 = inlined_call_operand.vmem [shape: f32[8,1], index: 2, kind: input, shape index: {}]
  %s3 = inlined_call_operand.<no memory space> [shape: f32[1,1], index: 3, kind: input, shape index: {}]
  %s4 = inlined_call_operand.vmem [shape: f32[2,8,128], index: 4, kind: output, shape index: {}]
  %s5 = sld [smem:[#allocation0]]
  $region49: #{upsampling_block_forward.1} parent=0
    _
  %s7 = ssub.s32 1, %s5
  %s8 = scalar_select 0, %s7, %s5
  %9 = sst [smem:[#allocation2]] %s3
  loop: start=0, step=1, limit=4
  $region2: #{upsampling_block_forward.1} parent=0 // loop_pre_header
    _
  $region3: #{upsampling_block_forward.1} parent=0 // loop_header
    %s11 = sphi 0, %s15
    %p12 = scmp.ge.s32.totalorder %s11, 4
    %s21 = sphi 0, %s23
    %s24 = sphi 0, %s21
    %s25 = sphi 0, %s24
    %s41 = sphi 0, %s25
    %s45 = sphi 0, %s45
    %s47 = sphi 0, %s45
    %s48 = sphi 0, %s47
    %s62 = sphi 0, %s48
    %s66 = sphi 0, %s66
    %s68 = sphi 0, %s66
    %s69 = sphi 0, %s68
    %s83 = sphi 0, %s69
    %s87 = sphi 0, %s87
    %s89 = sphi 0, %s87
    %s90 = sphi 0, %s89
    %s104 = sphi 0, %s90
    %s110 = sphi 0, %s112
    %s113 = sphi 0, %s110
    %s114 = sphi 0, %s113
    %s130 = sphi 0, %s114
  $region4: #{upsampling_block_forward.1} parent=0 // loop_header_branch
    %14 = sbr.rel (%p12) target = $region8
  $region5: #{upsampling_block_forward.1} parent=0 // loop_body
    %s16 = ssub.s32 %s11, 1
    %s17 = ssub.s32 %s11, 2
    %s18 = sadd.s32 %s11, 1
    %s19 = ssub.s32 %s11, %s18
    %p20 = scmp.eq.s32.totalorder %s19, 0
    %s22 = sadd.s32 %s21, 1
    %s23 = scalar_select %p20, %s21, %s22
    %p26 = pneg %p20
    %p27 = scmp.eq.s32.totalorder %s11, 1
    %p28 = por %p26, %p27
    %p29 = scmp.ne.s32.totalorder %s21, %s24
    %p30 = scmp.eq.s32.totalorder %s11, 0
    %p31 = por %p29, %p30
    %p32 = scmp.ne.s32.totalorder %s21, %s24
    %p33 = scmp.eq.s32.totalorder %s16, 1
    %p34 = por %p32, %p33
    %p35 = scmp.ne.s32.totalorder %s24, %s25
    %p36 = scmp.eq.s32.totalorder %s16, 0
    %p37 = por %p35, %p36
    %p38 = scmp.ne.s32.totalorder %s24, %s25
    %p39 = scmp.eq.s32.totalorder %s17, 1
    %p40 = por %p38, %p39
    %p42 = scmp.ne.s32.totalorder %s25, %s41
    %p43 = scmp.eq.s32.totalorder %s17, 0
    %p44 = por %p42, %p43
    %s46 = sadd.s32 %s45, 1
    %p49 = scmp.eq.s32.totalorder %s11, 1
    %p50 = scmp.ne.s32.totalorder %s45, %s47
    %p51 = scmp.eq.s32.totalorder %s11, 0
    %p52 = por %p50, %p51
    %p53 = scmp.ne.s32.totalorder %s45, %s47
    %p54 = scmp.eq.s32.totalorder %s16, 1
    %p55 = por %p53, %p54
    %p56 = scmp.ne.s32.totalorder %s47, %s48
    %p57 = scmp.eq.s32.totalorder %s16, 0
    %p58 = por %p56, %p57
    %p59 = scmp.ne.s32.totalorder %s47, %s48
    %p60 = scmp.eq.s32.totalorder %s17, 1
    %p61 = por %p59, %p60
    %p63 = scmp.ne.s32.totalorder %s48, %s62
    %p64 = scmp.eq.s32.totalorder %s17, 0
    %p65 = por %p63, %p64
    %s67 = sadd.s32 %s66, 1
    %p70 = scmp.eq.s32.totalorder %s11, 1
    %p71 = scmp.ne.s32.totalorder %s66, %s68
    %p72 = scmp.eq.s32.totalorder %s11, 0
    %p73 = por %p71, %p72
    %p74 = scmp.ne.s32.totalorder %s66, %s68
    %p75 = scmp.eq.s32.totalorder %s16, 1
    %p76 = por %p74, %p75
    %p77 = scmp.ne.s32.totalorder %s68, %s69
    %p78 = scmp.eq.s32.totalorder %s16, 0
    %p79 = por %p77, %p78
    %p80 = scmp.ne.s32.totalorder %s68, %s69
    %p81 = scmp.eq.s32.totalorder %s17, 1
    %p82 = por %p80, %p81
    %p84 = scmp.ne.s32.totalorder %s69, %s83
    %p85 = scmp.eq.s32.totalorder %s17, 0
    %p86 = por %p84, %p85
    %s88 = sadd.s32 %s87, 1
    %p91 = scmp.eq.s32.totalorder %s11, 1
    %p92 = scmp.ne.s32.totalorder %s87, %s89
    %p93 = scmp.eq.s32.totalorder %s11, 0
    %p94 = por %p92, %p93
    %p95 = scmp.ne.s32.totalorder %s87, %s89
    %p96 = scmp.eq.s32.totalorder %s16, 1
    %p97 = por %p95, %p96
    %p98 = scmp.ne.s32.totalorder %s89, %s90
    %p99 = scmp.eq.s32.totalorder %s16, 0
    %p100 = por %p98, %p99
    %p101 = scmp.ne.s32.totalorder %s89, %s90
    %p102 = scmp.eq.s32.totalorder %s17, 1
    %p103 = por %p101, %p102
    %p105 = scmp.ne.s32.totalorder %s90, %s104
    %p106 = scmp.eq.s32.totalorder %s17, 0
    %p107 = por %p105, %p106
    %s108 = ssub.s32 %s11, %s18
    %p109 = scmp.eq.s32.totalorder %s108, 0
    %s111 = sadd.s32 %s110, 1
    %s112 = scalar_select %p109, %s110, %s111
    %p115 = pneg %p109
    %p116 = scmp.eq.s32.totalorder %s11, 1
    %p117 = por %p115, %p116
    %p118 = scmp.ne.s32.totalorder %s110, %s113
    %p119 = scmp.eq.s32.totalorder %s11, 0
    %p120 = por %p118, %p119
    %p121 = scmp.ne.s32.totalorder %s110, %s113
    %p122 = scmp.eq.s32.totalorder %s16, 1
    %p123 = por %p121, %p122
    %p124 = scmp.ne.s32.totalorder %s113, %s114
    %p125 = scmp.eq.s32.totalorder %s16, 0
    %p126 = por %p124, %p125
    %p127 = scmp.ne.s32.totalorder %s113, %s114
    %p128 = scmp.eq.s32.totalorder %s17, 1
    %p129 = por %p127, %p128
    %p131 = scmp.ne.s32.totalorder %s114, %s130
    %p132 = scmp.eq.s32.totalorder %s17, 0
    %p133 = por %p131, %p132
    %p134 = scmp.le.s32.totalorder 1, %s11
    %p135 = scmp.lt.s32.totalorder %s11, 3
    %p136 = pnand %p134, %p135
    %p137 = pneg %p136
    // Predicated region
    $region9: #{upsampling_block_forward.1} parent=5 // pred_check
      _
    $region10: #{upsampling_block_forward.1} parent=5 // pred_check_branch
      %139 = sbr.rel (%p136) target = $region12
    $region11: #{upsampling_block_forward.1} parent=5 // pred_region
      %s140 = ssub.s32 %s11, 1
      // Predicated region
      $region13: #{upsampling_block_forward.1} parent=11 // pred_check
        %p141 = pneg %p58
      $region14: #{upsampling_block_forward.1} parent=11 // pred_check_branch
        %143 = sbr.rel (%p141) target = $region16
      $region15: #{upsampling_block_forward.1} parent=11 // pred_region
        _
      $region16: #{upsampling_block_forward.1} parent=11 // pred_fallthru
        _
      // Predicated region
      $region17: #{upsampling_block_forward.1} parent=11 // pred_check
        %p144 = pneg %p79
      $region18: #{upsampling_block_forward.1} parent=11 // pred_check_branch
        %146 = sbr.rel (%p144) target = $region20
      $region19: #{upsampling_block_forward.1} parent=11 // pred_region
        _
      $region20: #{upsampling_block_forward.1} parent=11 // pred_fallthru
        _
      // Predicated region
      $region21: #{upsampling_block_forward.1} parent=11 // pred_check
        %p147 = pneg %p100
      $region22: #{upsampling_block_forward.1} parent=11 // pred_check_branch
        %149 = sbr.rel (%p147) target = $region24
      $region23: #{upsampling_block_forward.1} parent=11 // pred_region
        _
      $region24: #{upsampling_block_forward.1} parent=11 // pred_fallthru
        _
    $region12: #{upsampling_block_forward.1} parent=5 // pred_fallthru
      _
    %p150 = scmp.lt.s32.totalorder %s11, 2
    // Predicated region
    $region25: #{upsampling_block_forward.1} parent=5 // pred_check
      %p151 = pneg %p150
    $region26: #{upsampling_block_forward.1} parent=5 // pred_check_branch
      %153 = sbr.rel (%p151) target = $region28
    $region27: #{upsampling_block_forward.1} parent=5 // pred_region
      // Predicated region
      $region29: #{upsampling_block_forward.1} parent=27 // pred_check
        %p154 = pneg %p31
      $region30: #{upsampling_block_forward.1} parent=27 // pred_check_branch
        %156 = sbr.rel (%p154) target = $region32
      $region31: #{upsampling_block_forward.1} parent=27 // pred_region
        %p157 = scmp.lt.s32.totalorder %s11, 1
        %s158 = scalar_select %p157, %s11, 1
        %s159 = smul.addr %s158, 2
        %s160 = smul.addr %s159, 4
        %s161 = scalar_lea.vmem %s0, %s160
      $region32: #{upsampling_block_forward.1} parent=27 // pred_fallthru
        _
    $region28: #{upsampling_block_forward.1} parent=5 // pred_fallthru
      _
    %p162 = scmp.le.s32.totalorder 1, %s11
    %p163 = scmp.lt.s32.totalorder %s11, 3
    %p164 = pnand %p162, %p163
    %p165 = pneg %p164
    // Predicated region
    $region33: #{upsampling_block_forward.1} parent=5 // pred_check
      _
    $region34: #{upsampling_block_forward.1} parent=5 // pred_check_branch
      %167 = sbr.rel (%p164) target = $region36
    $region35: #{upsampling_block_forward.1} parent=5 // pred_region
      %s168 = ssub.s32 %s11, 1
      %p169 = scmp.lt.s32.totalorder %s16, 1
      %s170 = scalar_select %p169, %s16, 1
      %s171 = smul.addr %s170, 2
      %s172 = smul.addr %s171, 4
      %s173 = scalar_lea.vmem %s0, %s172
      %p174 = pneg %p37
      %p175 = pneg %p34
      %p176 = pneg %p58
      %p177 = pneg %p55
      %p178 = pneg %p79
      %p179 = pneg %p76
      %p180 = pneg %p100
      %p181 = pneg %p97
      %p182 = pneg %p126
      %p183 = pneg %p123
      %p184 = scmp.lt.s32.totalorder %s16, 1
      %s185 = scalar_select %p184, %s16, 1
      %s186 = smul.addr %s185, 8
      %s187 = scalar_lea.vmem %s4, %s186
      %p188 = scmp.lt.s32.totalorder %s16, 1
      %s189 = scalar_select %p188, %s16, 1
      %s190 = smul.addr %s189, 2
      %s191 = smul.addr %s190, 4
      %s192 = scalar_lea.vmem %s0, %s191
      %p193 = scmp.lt.s32.totalorder %s16, 1
      %s194 = scalar_select %p193, %s16, 1
      %s195 = smul.addr %s194, 8
      %s196 = scalar_lea.vmem %s4, %s195
      %v197 = vld [vmem:[%s192] sm:$0xf]
      %v198 = vld [vmem:[%s1] sm:$0xff]
      %v199 = vld [vmem:[%s192] sm:$0xff]
      %s200 = scalar_lea.vmem %s1, 8
      %v201 = vld [vmem:[%s200] sm:$0xff]
      %v203 = vcombine.high %v199, %v199
      %204 = vrot.lane.b32.xlu0 %v199, 127
      %v205 = vpop.permute.xlu0 %204
      %206 = vrot.lane.b32.xlu0 %v203, 127
      %v207 = vpop.permute.xlu0 %206
      %vm208 = vcmask 1039360
      %v209 = vsel %vm208, %v205, %v207
      %vm210 = vcmask 31744
      %v212 = vsel %vm210, %v201, 0
      %vm214 = vcmask 1043456
      %v215 = vsel %vm214, %v209, 0
      %217 = vmatprep.subr.mxu0 0.0
      %218 = vmatpush1.msra.mxu0 %v215
      %219 = vmatprep.subr.mxu0 0.0
      %220 = vmatpush1.msra.mxu0 0.0
      %221 = vmatprep.subr.mxu0 0.0
      %222 = vmatpush1.msra.mxu0 0.0
      %223 = vmatprep.subr.mxu0 0.0
      %224 = vmatpush1.msra.mxu0 0.0
      %225 = vmatprep.subr.mxu0 0.0
      %226 = vmatpush1.msra.mxu0 0.0
      %227 = vmatprep.subr.mxu0 0.0
      %228 = vmatpush1.msra.mxu0 0.0
      %229 = vmatprep.subr.mxu0 0.0
      %230 = vmatpush1.msra.mxu0 0.0
      %231 = vmatprep.subr.mxu0 0.0
      %232 = vmatpush1.msra.mxu0 0.0
      %233 = vmatprep.subr.mxu0 0.0
      %234 = vmatpush1.msra.mxu0 0.0
      %235 = vmatprep.subr.mxu0 0.0
      %236 = vmatpush1.msra.mxu0 0.0
      %237 = vmatprep.subr.mxu0 0.0
      %238 = vmatpush1.msra.mxu0 0.0
      %239 = vmatprep.subr.mxu0 0.0
      %240 = vmatpush1.msra.mxu0 0.0
      %241 = vmatprep.subr.mxu0 0.0
      %242 = vmatpush1.msra.mxu0 0.0
      %243 = vmatprep.subr.mxu0 0.0
      %244 = vmatpush1.msra.mxu0 0.0
      %245 = vmatprep.subr.mxu0 0.0
      %246 = vmatpush1.msra.mxu0 0.0
      %247 = vmatprep.subr.mxu0 0.0
      %248 = vmatpush1.msra.mxu0 0.0
      %249 = vmatprep.subr.mxu0 0.0
      %250 = vmatpush1.msra.mxu0 0.0
      %251 = vmatprep.subr.mxu0 0.0
      %252 = vmatpush1.msra.mxu0 0.0
      %253 = vmatprep.subr.mxu0 0.0
      %254 = vmatpush1.msra.mxu0 0.0
      %255 = vmatprep.subr.mxu0 0.0
      %256 = vmatpush1.msra.mxu0 0.0
      %257 = vmatprep.subr.mxu0 0.0
      %258 = vmatpush1.msra.mxu0 0.0
      %259 = vmatprep.subr.mxu0 0.0
      %260 = vmatpush1.msra.mxu0 0.0
      %261 = vmatprep.subr.mxu0 0.0
      %262 = vmatpush1.msra.mxu0 0.0
      %263 = vmatprep.subr.mxu0 0.0
      %264 = vmatpush1.msra.mxu0 0.0
      %265 = vmatprep.subr.mxu0 0.0
      %266 = vmatpush1.msra.mxu0 0.0
      %267 = vmatprep.subr.mxu0 0.0
      %268 = vmatpush1.msra.mxu0 0.0
      %269 = vmatprep.subr.mxu0 0.0
      %270 = vmatpush1.msra.mxu0 0.0
      %271 = vmatprep.subr.mxu0 0.0
      %272 = vmatpush1.msra.mxu0 0.0
      %273 = vmatprep.subr.mxu0 0.0
      %274 = vmatpush1.msra.mxu0 0.0
      %275 = vmatprep.subr.mxu0 0.0
      %276 = vmatpush1.msra.mxu0 0.0
      %277 = vmatprep.subr.mxu0 0.0
      %278 = vmatpush1.msra.mxu0 0.0
      %279 = vmatprep.subr.mxu0 0.0
      %280 = vmatpush1.msra.mxu0 0.0
      %281 = vmatprep.mubr.f32.mxu0 0.0
      %282 = vmatmul.mubr.f32.gmra.mrb[0].mxu0 %v212
      %v283 = vpop.f32.mrb[0].mxu0
      %v284 = vadd.f32 0.0, %v283
      %v285 = vpop.f32.mrb[0].mxu0
      %286 = vdwg.mxu0
      %v288 = vsel %vm210, %v198, 0
      %v291 = vsel %vm214, %v197, 0
      %293 = vmatprep.subr.mxu0 0.0
      %294 = vmatpush1.msra.mxu0 %v291
      %295 = vmatprep.subr.mxu0 0.0
      %296 = vmatpush1.msra.mxu0 0.0
      %297 = vmatprep.subr.mxu0 0.0
      %298 = vmatpush1.msra.mxu0 0.0
      %299 = vmatprep.subr.mxu0 0.0
      %300 = vmatpush1.msra.mxu0 0.0
      %301 = vmatprep.subr.mxu0 0.0
      %302 = vmatpush1.msra.mxu0 0.0
      %303 = vmatprep.subr.mxu0 0.0
      %304 = vmatpush1.msra.mxu0 0.0
      %305 = vmatprep.subr.mxu0 0.0
      %306 = vmatpush1.msra.mxu0 0.0
      %307 = vmatprep.subr.mxu0 0.0
      %308 = vmatpush1.msra.mxu0 0.0
      %309 = vmatprep.subr.mxu0 0.0
      %310 = vmatpush1.msra.mxu0 0.0
      %311 = vmatprep.subr.mxu0 0.0
      %312 = vmatpush1.msra.mxu0 0.0
      %313 = vmatprep.subr.mxu0 0.0
      %314 = vmatpush1.msra.mxu0 0.0
      %315 = vmatprep.subr.mxu0 0.0
      %316 = vmatpush1.msra.mxu0 0.0
      %317 = vmatprep.subr.mxu0 0.0
      %318 = vmatpush1.msra.mxu0 0.0
      %319 = vmatprep.subr.mxu0 0.0
      %320 = vmatpush1.msra.mxu0 0.0
      %321 = vmatprep.subr.mxu0 0.0
      %322 = vmatpush1.msra.mxu0 0.0
      %323 = vmatprep.subr.mxu0 0.0
      %324 = vmatpush1.msra.mxu0 0.0
      %325 = vmatprep.subr.mxu0 0.0
      %326 = vmatpush1.msra.mxu0 0.0
      %327 = vmatprep.subr.mxu0 0.0
      %328 = vmatpush1.msra.mxu0 0.0
      %329 = vmatprep.subr.mxu0 0.0
      %330 = vmatpush1.msra.mxu0 0.0
      %331 = vmatprep.subr.mxu0 0.0
      %332 = vmatpush1.msra.mxu0 0.0
      %333 = vmatprep.subr.mxu0 0.0
      %334 = vmatpush1.msra.mxu0 0.0
      %335 = vmatprep.subr.mxu0 0.0
      %336 = vmatpush1.msra.mxu0 0.0
      %337 = vmatprep.subr.mxu0 0.0
      %338 = vmatpush1.msra.mxu0 0.0
      %339 = vmatprep.subr.mxu0 0.0
      %340 = vmatpush1.msra.mxu0 0.0
      %341 = vmatprep.subr.mxu0 0.0
      %342 = vmatpush1.msra.mxu0 0.0
      %343 = vmatprep.subr.mxu0 0.0
      %344 = vmatpush1.msra.mxu0 0.0
      %345 = vmatprep.subr.mxu0 0.0
      %346 = vmatpush1.msra.mxu0 0.0
      %347 = vmatprep.subr.mxu0 0.0
      %348 = vmatpush1.msra.mxu0 0.0
      %349 = vmatprep.subr.mxu0 0.0
      %350 = vmatpush1.msra.mxu0 0.0
      %351 = vmatprep.subr.mxu0 0.0
      %352 = vmatpush1.msra.mxu0 0.0
      %353 = vmatprep.subr.mxu0 0.0
      %354 = vmatpush1.msra.mxu0 0.0
      %355 = vmatprep.subr.mxu0 0.0
      %356 = vmatpush1.msra.mxu0 0.0
      %357 = vmatprep.mubr.f32.mxu0 0.0
      %358 = vmatmul.mubr.f32.gmra.mrb[0].mxu0 %v288
      %v359 = vpop.f32.mrb[0].mxu0
      %v360 = vadd.f32 %v284, %v359
      %v361 = vpop.f32.mrb[0].mxu0
      %362 = vdwg.mxu0
      %v363 = vld [vmem:[%s192] sm:$0xff]
      %s364 = scalar_lea.vmem %s1, 16
      %v365 = vld [vmem:[%s364] sm:$0xff]
      %v367 = vcombine.high %v363, %v363
      %368 = vrot.lane.b32.xlu0 %v363, 126
      %v369 = vpop.permute.xlu0 %368
      %370 = vrot.lane.b32.xlu0 %v367, 126
      %v371 = vpop.permute.xlu0 %370
      %vm372 = vcmask 1031168
      %v373 = vsel %vm372, %v369, %v371
      %v375 = vsel %vm210, %v365, 0
      %v377 = vsel %vm214, %v373, 0
      %379 = vmatprep.subr.mxu0 0.0
      %380 = vmatpush1.msra.mxu0 %v377
      %381 = vmatprep.subr.mxu0 0.0
      %382 = vmatpush1.msra.mxu0 0.0
      %383 = vmatprep.subr.mxu0 0.0
      %384 = vmatpush1.msra.mxu0 0.0
      %385 = vmatprep.subr.mxu0 0.0
      %386 = vmatpush1.msra.mxu0 0.0
      %387 = vmatprep.subr.mxu0 0.0
      %388 = vmatpush1.msra.mxu0 0.0
      %389 = vmatprep.subr.mxu0 0.0
      %390 = vmatpush1.msra.mxu0 0.0
      %391 = vmatprep.subr.mxu0 0.0
      %392 = vmatpush1.msra.mxu0 0.0
      %393 = vmatprep.subr.mxu0 0.0
      %394 = vmatpush1.msra.mxu0 0.0
      %395 = vmatprep.subr.mxu0 0.0
      %396 = vmatpush1.msra.mxu0 0.0
      %397 = vmatprep.subr.mxu0 0.0
      %398 = vmatpush1.msra.mxu0 0.0
      %399 = vmatprep.subr.mxu0 0.0
      %400 = vmatpush1.msra.mxu0 0.0
      %401 = vmatprep.subr.mxu0 0.0
      %402 = vmatpush1.msra.mxu0 0.0
      %403 = vmatprep.subr.mxu0 0.0
      %404 = vmatpush1.msra.mxu0 0.0
      %405 = vmatprep.subr.mxu0 0.0
      %406 = vmatpush1.msra.mxu0 0.0
      %407 = vmatprep.subr.mxu0 0.0
      %408 = vmatpush1.msra.mxu0 0.0
      %409 = vmatprep.subr.mxu0 0.0
      %410 = vmatpush1.msra.mxu0 0.0
      %411 = vmatprep.subr.mxu0 0.0
      %412 = vmatpush1.msra.mxu0 0.0
      %413 = vmatprep.subr.mxu0 0.0
      %414 = vmatpush1.msra.mxu0 0.0
      %415 = vmatprep.subr.mxu0 0.0
      %416 = vmatpush1.msra.mxu0 0.0
      %417 = vmatprep.subr.mxu0 0.0
      %418 = vmatpush1.msra.mxu0 0.0
      %419 = vmatprep.subr.mxu0 0.0
      %420 = vmatpush1.msra.mxu0 0.0
      %421 = vmatprep.subr.mxu0 0.0
      %422 = vmatpush1.msra.mxu0 0.0
      %423 = vmatprep.subr.mxu0 0.0
      %424 = vmatpush1.msra.mxu0 0.0
      %425 = vmatprep.subr.mxu0 0.0
      %426 = vmatpush1.msra.mxu0 0.0
      %427 = vmatprep.subr.mxu0 0.0
      %428 = vmatpush1.msra.mxu0 0.0
      %429 = vmatprep.subr.mxu0 0.0
      %430 = vmatpush1.msra.mxu0 0.0
      %431 = vmatprep.subr.mxu0 0.0
      %432 = vmatpush1.msra.mxu0 0.0
      %433 = vmatprep.subr.mxu0 0.0
      %434 = vmatpush1.msra.mxu0 0.0
      %435 = vmatprep.subr.mxu0 0.0
      %436 = vmatpush1.msra.mxu0 0.0
      %437 = vmatprep.subr.mxu0 0.0
      %438 = vmatpush1.msra.mxu0 0.0
      %439 = vmatprep.subr.mxu0 0.0
      %440 = vmatpush1.msra.mxu0 0.0
      %441 = vmatprep.subr.mxu0 0.0
      %442 = vmatpush1.msra.mxu0 0.0
      %443 = vmatprep.mubr.f32.mxu0 0.0
      %444 = vmatmul.mubr.f32.gmra.mrb[0].mxu0 %v375
      %v445 = vpop.f32.mrb[0].mxu0
      %v446 = vadd.f32 0.0, %v445
      %v447 = vpop.f32.mrb[0].mxu0
      %448 = vdwg.mxu0
      %v449 = vadd.f32 %v360, %v446
      %v450 = vld [vmem:[%s192] sm:$0xff]
      %s451 = scalar_lea.vmem %s1, 24
      %v452 = vld [vmem:[%s451] sm:$0xff]
      %v454 = vcombine.high %v450, %v450
      %455 = vrot.lane.b32.xlu0 %v450, 125
      %v456 = vpop.permute.xlu0 %455
      %457 = vrot.lane.b32.xlu0 %v454, 125
      %v458 = vpop.permute.xlu0 %457
      %vm459 = vcmask 1022976
      %v460 = vsel %vm459, %v456, %v458
      %v462 = vsel %vm210, %v452, 0
      %v464 = vsel %vm214, %v460, 0
      %466 = vmatprep.subr.mxu0 0.0
      %467 = vmatpush1.msra.mxu0 %v464
      %468 = vmatprep.subr.mxu0 0.0
      %469 = vmatpush1.msra.mxu0 0.0
      %470 = vmatprep.subr.mxu0 0.0
      %471 = vmatpush1.msra.mxu0 0.0
      %472 = vmatprep.subr.mxu0 0.0
      %473 = vmatpush1.msra.mxu0 0.0
      %474 = vmatprep.subr.mxu0 0.0
      %475 = vmatpush1.msra.mxu0 0.0
      %476 = vmatprep.subr.mxu0 0.0
      %477 = vmatpush1.msra.mxu0 0.0
      %478 = vmatprep.subr.mxu0 0.0
      %479 = vmatpush1.msra.mxu0 0.0
      %480 = vmatprep.subr.mxu0 0.0
      %481 = vmatpush1.msra.mxu0 0.0
      %482 = vmatprep.subr.mxu0 0.0
      %483 = vmatpush1.msra.mxu0 0.0
      %484 = vmatprep.subr.mxu0 0.0
      %485 = vmatpush1.msra.mxu0 0.0
      %486 = vmatprep.subr.mxu0 0.0
      %487 = vmatpush1.msra.mxu0 0.0
      %488 = vmatprep.subr.mxu0 0.0
      %489 = vmatpush1.msra.mxu0 0.0
      %490 = vmatprep.subr.mxu0 0.0
      %491 = vmatpush1.msra.mxu0 0.0
      %492 = vmatprep.subr.mxu0 0.0
      %493 = vmatpush1.msra.mxu0 0.0
      %494 = vmatprep.subr.mxu0 0.0
      %495 = vmatpush1.msra.mxu0 0.0
      %496 = vmatprep.subr.mxu0 0.0
      %497 = vmatpush1.msra.mxu0 0.0
      %498 = vmatprep.subr.mxu0 0.0
      %499 = vmatpush1.msra.mxu0 0.0
      %500 = vmatprep.subr.mxu0 0.0
      %501 = vmatpush1.msra.mxu0 0.0
      %502 = vmatprep.subr.mxu0 0.0
      %503 = vmatpush1.msra.mxu0 0.0
      %504 = vmatprep.subr.mxu0 0.0
      %505 = vmatpush1.msra.mxu0 0.0
      %506 = vmatprep.subr.mxu0 0.0
      %507 = vmatpush1.msra.mxu0 0.0
      %508 = vmatprep.subr.mxu0 0.0
      %509 = vmatpush1.msra.mxu0 0.0
      %510 = vmatprep.subr.mxu0 0.0
      %511 = vmatpush1.msra.mxu0 0.0
      %512 = vmatprep.subr.mxu0 0.0
      %513 = vmatpush1.msra.mxu0 0.0
      %514 = vmatprep.subr.mxu0 0.0
      %515 = vmatpush1.msra.mxu0 0.0
      %516 = vmatprep.subr.mxu0 0.0
      %517 = vmatpush1.msra.mxu0 0.0
      %518 = vmatprep.subr.mxu0 0.0
      %519 = vmatpush1.msra.mxu0 0.0
      %520 = vmatprep.subr.mxu0 0.0
      %521 = vmatpush1.msra.mxu0 0.0
      %522 = vmatprep.subr.mxu0 0.0
      %523 = vmatpush1.msra.mxu0 0.0
      %524 = vmatprep.subr.mxu0 0.0
      %525 = vmatpush1.msra.mxu0 0.0
      %526 = vmatprep.subr.mxu0 0.0
      %527 = vmatpush1.msra.mxu0 0.0
      %528 = vmatprep.subr.mxu0 0.0
      %529 = vmatpush1.msra.mxu0 0.0
      %530 = vmatprep.mubr.f32.mxu0 0.0
      %531 = vmatmul.mubr.f32.gmra.mrb[0].mxu0 %v462
      %v532 = vpop.f32.mrb[0].mxu0
      %v533 = vadd.f32 0.0, %v532
      %v534 = vpop.f32.mrb[0].mxu0
      %535 = vdwg.mxu0
      %v536 = vadd.f32 %v449, %v533
      %v537 = vld [vmem:[%s192] sm:$0xff]
      %s538 = scalar_lea.vmem %s1, 32
      %v539 = vld [vmem:[%s538] sm:$0xff]
      %v541 = vcombine.high %v537, %v537
      %542 = vrot.lane.b32.xlu0 %v537, 124
      %v543 = vpop.permute.xlu0 %542
      %544 = vrot.lane.b32.xlu0 %v541, 124
      %v545 = vpop.permute.xlu0 %544
      %vm546 = vcmask 1014784
      %v547 = vsel %vm546, %v543, %v545
      %v549 = vsel %vm210, %v539, 0
      %v551 = vsel %vm214, %v547, 0
      %553 = vmatprep.subr.mxu0 0.0
      %554 = vmatpush1.msra.mxu0 %v551
      %555 = vmatprep.subr.mxu0 0.0
      %556 = vmatpush1.msra.mxu0 0.0
      %557 = vmatprep.subr.mxu0 0.0
      %558 = vmatpush1.msra.mxu0 0.0
      %559 = vmatprep.subr.mxu0 0.0
      %560 = vmatpush1.msra.mxu0 0.0
      %561 = vmatprep.subr.mxu0 0.0
      %562 = vmatpush1.msra.mxu0 0.0
      %563 = vmatprep.subr.mxu0 0.0
      %564 = vmatpush1.msra.mxu0 0.0
      %565 = vmatprep.subr.mxu0 0.0
      %566 = vmatpush1.msra.mxu0 0.0
      %567 = vmatprep.subr.mxu0 0.0
      %568 = vmatpush1.msra.mxu0 0.0
      %569 = vmatprep.subr.mxu0 0.0
      %570 = vmatpush1.msra.mxu0 0.0
      %571 = vmatprep.subr.mxu0 0.0
      %572 = vmatpush1.msra.mxu0 0.0
      %573 = vmatprep.subr.mxu0 0.0
      %574 = vmatpush1.msra.mxu0 0.0
      %575 = vmatprep.subr.mxu0 0.0
      %576 = vmatpush1.msra.mxu0 0.0
      %577 = vmatprep.subr.mxu0 0.0
      %578 = vmatpush1.msra.mxu0 0.0
      %579 = vmatprep.subr.mxu0 0.0
      %580 = vmatpush1.msra.mxu0 0.0
      %581 = vmatprep.subr.mxu0 0.0
      %582 = vmatpush1.msra.mxu0 0.0
      %583 = vmatprep.subr.mxu0 0.0
      %584 = vmatpush1.msra.mxu0 0.0
      %585 = vmatprep.subr.mxu0 0.0
      %586 = vmatpush1.msra.mxu0 0.0
      %587 = vmatprep.subr.mxu0 0.0
      %588 = vmatpush1.msra.mxu0 0.0
      %589 = vmatprep.subr.mxu0 0.0
      %590 = vmatpush1.msra.mxu0 0.0
      %591 = vmatprep.subr.mxu0 0.0
      %592 = vmatpush1.msra.mxu0 0.0
      %593 = vmatprep.subr.mxu0 0.0
      %594 = vmatpush1.msra.mxu0 0.0
      %595 = vmatprep.subr.mxu0 0.0
      %596 = vmatpush1.msra.mxu0 0.0
      %597 = vmatprep.subr.mxu0 0.0
      %598 = vmatpush1.msra.mxu0 0.0
      %599 = vmatprep.subr.mxu0 0.0
      %600 = vmatpush1.msra.mxu0 0.0
      %601 = vmatprep.subr.mxu0 0.0
      %602 = vmatpush1.msra.mxu0 0.0
      %603 = vmatprep.subr.mxu0 0.0
      %604 = vmatpush1.msra.mxu0 0.0
      %605 = vmatprep.subr.mxu0 0.0
      %606 = vmatpush1.msra.mxu0 0.0
      %607 = vmatprep.subr.mxu0 0.0
      %608 = vmatpush1.msra.mxu0 0.0
      %609 = vmatprep.subr.mxu0 0.0
      %610 = vmatpush1.msra.mxu0 0.0
      %611 = vmatprep.subr.mxu0 0.0
      %612 = vmatpush1.msra.mxu0 0.0
      %613 = vmatprep.subr.mxu0 0.0
      %614 = vmatpush1.msra.mxu0 0.0
      %615 = vmatprep.subr.mxu0 0.0
      %616 = vmatpush1.msra.mxu0 0.0
      %617 = vmatprep.mubr.f32.mxu0 0.0
      %618 = vmatmul.mubr.f32.gmra.mrb[0].mxu0 %v549
      %v619 = vpop.f32.mrb[0].mxu0
      %v620 = vadd.f32 0.0, %v619
      %v621 = vpop.f32.mrb[0].mxu0
      %622 = vdwg.mxu0
      %v623 = vadd.f32 %v536, %v620
      %v624 = vld [vmem:[%s2] sm:$0xff]
      %626 = vset.pattern.permute.xlu0 0
      %627 = vperm.xlu0 %626, %v624
      %v628 = vpop.permute.xlu0 %627
      %v630 = vadd.f32 %v623, %v628
      %s631 = sld [smem:[#allocation2]]
      %vm632 = vcmp.ge.f32.partialorder %v630, 0.0
      %v633 = vstv %s631
      %v634 = vmul.f32 %v633, %v630
      %v635 = vsel %vm632, %v630, %v634
      %636 = vst [vmem:[%s196] sm:$0xff] %v635
      %p637 = scmp.lt.s32.totalorder %s16, 1
      %s638 = scalar_select %p637, %s16, 1
      %s639 = smul.addr %s638, 8
      %s640 = scalar_lea.vmem %s4, %s639
      // Predicated region
      $region37: #{upsampling_block_forward.1} parent=35 // pred_check
        %p641 = pneg %p123
      $region38: #{upsampling_block_forward.1} parent=35 // pred_check_branch
        %643 = sbr.rel (%p641) target = $region40
      $region39: #{upsampling_block_forward.1} parent=35 // pred_region
        _
      $region40: #{upsampling_block_forward.1} parent=35 // pred_fallthru
        _
    $region36: #{upsampling_block_forward.1} parent=5 // pred_fallthru
      _
    %p644 = scmp.le.s32.totalorder 2, %s11
    // Predicated region
    $region41: #{upsampling_block_forward.1} parent=5 // pred_check
      %p645 = pneg %p644
    $region42: #{upsampling_block_forward.1} parent=5 // pred_check_branch
      %647 = sbr.rel (%p645) target = $region44
    $region43: #{upsampling_block_forward.1} parent=5 // pred_region
      %s648 = ssub.s32 %s11, 2
      // Predicated region
      $region45: #{upsampling_block_forward.1} parent=43 // pred_check
        %p649 = pneg %p129
      $region46: #{upsampling_block_forward.1} parent=43 // pred_check_branch
        %651 = sbr.rel (%p649) target = $region48
      $region47: #{upsampling_block_forward.1} parent=43 // pred_region
        %p652 = scmp.lt.s32.totalorder %s17, 1
        %s653 = scalar_select %p652, %s17, 1
        %s654 = smul.addr %s653, 8
        %s655 = scalar_lea.vmem %s4, %s654
      $region48: #{upsampling_block_forward.1} parent=43 // pred_fallthru
        _
    $region44: #{upsampling_block_forward.1} parent=5 // pred_fallthru
      _
  $region6: #{upsampling_block_forward.1} parent=0 // loop_footer
    %s15 = sadd.s32 1, %s11
  $region7: #{upsampling_block_forward.1} parent=0 // loop_footer_branch
    %10 = sbr.rel target = $region3
  $region8: #{upsampling_block_forward.1} parent=0 // loop_exit
    _

</llo_original>
